<compile_context>
chip_gen: v5e
topology: v5e:2x2
jax: 0.10.0
libtpu: 0.0.40
codegen_flags: <defaults>
</compile_context>

<pallas_src>
import functools
import math

import jax
import jax.numpy as jnp
from jax.experimental import pallas as pl
from jax.experimental.pallas import tpu as pltpu


def bidaf_attention_kernel(c_ref, q_ref, cmadd_ref, qmadd_ref,
                           cw_ref, qw_ref, cqw_ref, bias_ref,
                           out_ref, *, use_bf16_matmul):
    H = c_ref.shape[-1]

    c = c_ref[...]             # (Bb, c_len, H)  caller dtype
    q = q_ref[...]             # (Bb, q_len, H)  caller dtype
    cm_add = cmadd_ref[...]    # (Bb, c_len, 1)  f32 additive mask (0 / -1e30)
    qm_add = qmadd_ref[...]    # (Bb, 1, q_len)  f32 additive mask
    cw = cw_ref[...]           # (1, H) f32, lane-dense
    qw = qw_ref[...]           # (1, H) f32
    cqw = cqw_ref[...]         # (1, H) f32
    bias = bias_ref[0]         # scalar f32 (SMEM)

    mm_dtype = jnp.bfloat16 if use_bf16_matmul else c.dtype

    cf = c.astype(jnp.float32)
    qf = q.astype(jnp.float32)

    # ---- similarity matrix s = c@cw + (q@qw)^T + (c*cqw)@q^T + bias ----
    # Degenerate (H,1) MXU dots replaced by VPU multiply + cross-lane reduce.
    s0 = jnp.sum(cf * cw[None, :, :], axis=-1, keepdims=True)      # (Bb, c_len, 1)
    s1r = jnp.sum(qf * qw[None, :, :], axis=-1)[:, None, :]        # (Bb, 1, q_len)
    c_scaled = (cf * cqw[None, :, :]).astype(mm_dtype)
    s2 = jnp.einsum('bch,bqh->bcq', c_scaled, q.astype(mm_dtype),
                    preferred_element_type=jnp.float32)            # (Bb, c_len, q_len)
    s = s0 + s1r + s2 + bias

    # ---- c-softmax (dim=1) first; contract into tmp and drop it ----
    logits2 = s + cm_add
    m2 = jnp.max(logits2, axis=1, keepdims=True)
    e2 = jnp.exp(logits2 - m2)
    s2sm = e2 / jnp.sum(e2, axis=1, keepdims=True)                 # exact division
    # Re-associated:  b = s1 @ (s2^T @ c)   (no (c_len, c_len) intermediate)
    tmp = jnp.einsum('bcq,bch->bqh', s2sm.astype(mm_dtype), c.astype(mm_dtype),
                     preferred_element_type=jnp.float32)           # (Bb, q_len, H)

    # ---- q-softmax (dim=2) ----
    logits1 = s + qm_add
    m1 = jnp.max(logits1, axis=2, keepdims=True)
    e1 = jnp.exp(logits1 - m1)
    s1 = e1 / jnp.sum(e1, axis=2, keepdims=True)                   # exact division

    s1_mm = s1.astype(mm_dtype)
    a = jnp.einsum('bcq,bqh->bch', s1_mm, q.astype(mm_dtype),
                   preferred_element_type=jnp.float32)             # (Bb, c_len, H)
    b = jnp.einsum('bcq,bqh->bch', s1_mm, tmp.astype(mm_dtype),
                   preferred_element_type=jnp.float32)             # (Bb, c_len, H)

    # ---- single lane-dense 4H output (c | a | c*a | c*b) ----
    od = out_ref.dtype
    out_ref[:, :, 0:H] = c.astype(od)
    out_ref[:, :, H:2 * H] = a.astype(od)
    out_ref[:, :, 2 * H:3 * H] = (cf * a).astype(od)
    out_ref[:, :, 3 * H:4 * H] = (cf * b).astype(od)


def _vmem_config():
    """Returns (block_b search budget, vmem_limit_bytes, keep >=2 grid steps)."""
    cap = 128 * 1024 * 1024
    try:
        info = pltpu.get_tpu_info()
        cap = int(getattr(info, "vmem_capacity_bytes", cap))
    except Exception:
        pass
    if cap <= 64 * 1024 * 1024:
        # v7x-class: 64 MiB physical VMEM, 2 TensorCores/chip -> keep both busy.
        return 16 * 1024 * 1024, 48 * 1024 * 1024, True
    # v5e / v6e: 128 MiB physical VMEM, single TensorCore -> grow the tile.
    return 48 * 1024 * 1024, 96 * 1024 * 1024, False


def _choose_block_b(batch, c_len, q_len, hidden, io_itemsize, *,
                    vmem_budget_bytes, keep_two_steps):
    """Largest batch block whose per-step footprint fits the VMEM budget."""
    def per_step_bytes(bb):
        # Double-buffered DMA tiles: c, q, masks in; 4H output slab out.
        io = bb * (c_len + q_len) * hidden * io_itemsize           # c, q
        io += bb * c_len * 4 * hidden * io_itemsize                # 4H output
        io += bb * (c_len + q_len) * 4                             # additive masks
        total = 2 * io
        # Live f32 intermediates inside the body (conservative):
        #   ~6 (c_len, q_len): s, logits/exp/probs for both softmaxes (+ copies)
        #   ~5 (c_len, H):     cf, c_scaled, a, b, c*a / c*b staging
        #   ~3 (q_len, H):     qf, tmp (+ low-precision copy)
        total += bb * (6 * c_len * q_len
                       + 5 * c_len * hidden
                       + 3 * q_len * hidden) * 4
        return total

    best = 1
    for d in range(1, batch + 1):
        if batch % d:
            continue
        if keep_two_steps and batch >= 2 and batch // d < 2:
            continue
        if per_step_bytes(d) <= vmem_budget_bytes:
            best = d
    return best


def bidaf_attention(c, q, c_mask, q_mask, c_weight, q_weight, cq_weight, bias,
                    *, block_b=None, use_bf16_matmul=False):
    B, c_len, H = c.shape
    q_len = q.shape[1]
    dtype = c.dtype
    NEG = jnp.float32(-1e30)

    # Additive masks: 0 where valid, -1e30 where padded (exact for {0,1} masks).
    cm_add = ((1.0 - c_mask.astype(jnp.float32)) * NEG).reshape(B, c_len, 1)
    qm_add = ((1.0 - q_mask.astype(jnp.float32)) * NEG).reshape(B, 1, q_len)

    cw = c_weight.reshape(1, H).astype(jnp.float32)      # lane-dense rows
    qw = q_weight.reshape(1, H).astype(jnp.float32)
    cqw = cq_weight.reshape(1, H).astype(jnp.float32)
    bias_s = bias.reshape(1).astype(jnp.float32)         # SMEM scalar

    budget, vmem_limit, keep_two = _vmem_config()
    if block_b is None:
        block_b = _choose_block_b(B, c_len, q_len, H, jnp.dtype(dtype).itemsize,
                                  vmem_budget_bytes=budget,
                                  keep_two_steps=keep_two)
    grid = (B // block_b,)

    # TODO(synk): for large models, pad H / q_len to multiples of 128 for lane
    #             and MXU occupancy (skipped here: it would re-introduce a
    #             wrapper-side slice of the 4H output slab).
    # TODO(synk): when B // block_b == 1 on 2-TensorCore chips, add a c_len
    #             grid axis (needs a 2-pass c-softmax) to keep both cores busy.

    kernel = functools.partial(bidaf_attention_kernel,
                               use_bf16_matmul=use_bf16_matmul)

    out = pl.pallas_call(
        kernel,
        out_shape=jax.ShapeDtypeStruct((B, c_len, 4 * H), dtype),
        grid_spec=pltpu.PrefetchScalarGridSpec(
            num_scalar_prefetch=0,
            grid=grid,
            in_specs=[
                pl.BlockSpec((block_b, c_len, H), lambda i: (i, 0, 0)),   # c
                pl.BlockSpec((block_b, q_len, H), lambda i: (i, 0, 0)),   # q
                pl.BlockSpec((block_b, c_len, 1), lambda i: (i, 0, 0)),   # cm_add
                pl.BlockSpec((block_b, 1, q_len), lambda i: (i, 0, 0)),   # qm_add
                pl.BlockSpec((1, H), lambda i: (0, 0)),                   # c_weight
                pl.BlockSpec((1, H), lambda i: (0, 0)),                   # q_weight
                pl.BlockSpec((1, H), lambda i: (0, 0)),                   # cq_weight
                pl.BlockSpec(memory_space=pltpu.MemorySpace.SMEM),        # bias
            ],
            out_specs=pl.BlockSpec((block_b, c_len, 4 * H), lambda i: (i, 0, 0)),
        ),
        compiler_params=pltpu.CompilerParams(
            dimension_semantics=("parallel",),
            vmem_limit_bytes=vmem_limit,
        ),
    )(c, q, cm_add, qm_add, cw, qw, cqw, bias_s)

    return out


def _reference(c, q, c_mask, q_mask, cw, qw, cqw, bias):
    """Pure-JAX reference mirroring the PyTorch forward (eval mode)."""
    B, c_len, H = c.shape
    q_len = q.shape[1]
    s0 = jnp.matmul(c, cw.reshape(H, 1))                               # (B, c_len, 1)
    s1 = jnp.swapaxes(jnp.matmul(q, qw.reshape(H, 1)), 1, 2)           # (B, 1, q_len)
    s2 = jnp.matmul(c * cqw.reshape(1, 1, H), jnp.swapaxes(q, 1, 2))   # (B, c_len, q_len)
    s = s0 + s1 + s2 + bias.reshape(())
    cm = c_mask.astype(jnp.float32).reshape(B, c_len, 1)
    qm = q_mask.astype(jnp.float32).reshape(B, 1, q_len)
    s1m = jax.nn.softmax(qm * s + (1.0 - qm) * -1e30, axis=2)
    s2m = jax.nn.softmax(cm * s + (1.0 - cm) * -1e30, axis=1)
    a = jnp.matmul(s1m, q)
    b = jnp.matmul(jnp.matmul(s1m, jnp.swapaxes(s2m, 1, 2)), c)
    return jnp.concatenate([c, a, c * a, c * b], axis=2)


if __name__ == "__main__":
    B, c_len, q_len, H = 2, 16, 8, 32

    key = jax.random.PRNGKey(0)
    kc, kq, kcw, kqw, kcqw = jax.random.split(key, 5)

    c = jax.random.normal(kc, (B, c_len, H), dtype=jnp.float32)
    q = jax.random.normal(kq, (B, q_len, H), dtype=jnp.float32)

    # masks: valid lengths per batch element
    c_lens = jnp.array([16, 12])
    q_lens = jnp.array([8, 5])
    c_mask = (jnp.arange(c_len)[None, :] < c_lens[:, None]).astype(jnp.float32)
    q_mask = (jnp.arange(q_len)[None, :] < q_lens[:, None]).astype(jnp.float32)

    # xavier_uniform-style deterministic init (matching torch fan-in/fan-out rules)
    bound_w = math.sqrt(6.0 / (H + 1))      # c_weight, q_weight: shape (H, 1)
    bound_cq = math.sqrt(6.0 / (2 * H))     # cq_weight: shape (1, 1, H)
    c_weight = jax.random.uniform(kcw, (H, 1), jnp.float32, -bound_w, bound_w)
    q_weight = jax.random.uniform(kqw, (H, 1), jnp.float32, -bound_w, bound_w)
    cq_weight = jax.random.uniform(kcqw, (1, 1, H), jnp.float32, -bound_cq, bound_cq)
    bias = jnp.zeros((1,), jnp.float32)

    out = bidaf_attention(c, q, c_mask, q_mask, c_weight, q_weight, cq_weight, bias)
    out = jax.block_until_ready(out)

    ref = _reference(c, q, c_mask, q_mask, c_weight, q_weight, cq_weight, bias)
    assert out.shape == (B, c_len, 4 * H), out.shape
    err = float(jnp.max(jnp.abs(out - ref)))
    assert jnp.allclose(out, ref, atol=1e-4, rtol=1e-4), err

    print("KERNEL_OK")
</pallas_src>

<mosaic_0001>
module attributes {stable_mosaic.version = 11 : i64} {
  func.func @bidaf_attention_kernel(%arg0: i32, %arg1: memref<2x16x32xf32, #tpu.memory_space<vmem>>, %arg2: memref<2x8x32xf32, #tpu.memory_space<vmem>>, %arg3: memref<2x16x1xf32, #tpu.memory_space<vmem>>, %arg4: memref<2x1x8xf32, #tpu.memory_space<vmem>>, %arg5: memref<1x32xf32, #tpu.memory_space<vmem>>, %arg6: memref<1x32xf32, #tpu.memory_space<vmem>>, %arg7: memref<1x32xf32, #tpu.memory_space<vmem>>, %arg8: memref<1xf32, #tpu.memory_space<smem>>, %arg9: memref<2x16x128xf32, #tpu.memory_space<vmem>>) attributes {dimension_semantics = [#tpu.dimension_semantics<parallel>], iteration_bounds = array<i64: 1>, scalar_prefetch = 0 : i64, scratch_operands = 0 : i64, tpu.core_type = #tpu.core_type<tc>, window_params = [{transform_indices = @transform_0, window_bounds = array<i64: 2, 16, 32>}, {transform_indices = @transform_1, window_bounds = array<i64: 2, 8, 32>}, {transform_indices = @transform_2, window_bounds = array<i64: 2, 16, 1>}, {transform_indices = @transform_3, window_bounds = array<i64: 2, 1, 8>}, {pipeline_mode = #tpu.pipeline_mode<synchronous>, transform_indices = @transform_4, window_bounds = array<i64: 1, 32>}, {pipeline_mode = #tpu.pipeline_mode<synchronous>, transform_indices = @transform_5, window_bounds = array<i64: 1, 32>}, {pipeline_mode = #tpu.pipeline_mode<synchronous>, transform_indices = @transform_6, window_bounds = array<i64: 1, 32>}, {transform_indices = @transform_7, window_bounds = array<i64: 1>}, {transform_indices = @transform_8, window_bounds = array<i64: 2, 16, 128>}]} {
    %c0 = arith.constant 0 : index
    %c0_0 = arith.constant 0 : index
    %c0_1 = arith.constant 0 : index
    %0 = vector.load %arg1[%c0, %c0_0, %c0_1] : memref<2x16x32xf32, #tpu.memory_space<vmem>>, vector<2x16x32xf32>
    %c0_2 = arith.constant 0 : index
    %c0_3 = arith.constant 0 : index
    %c0_4 = arith.constant 0 : index
    %1 = vector.load %arg2[%c0_2, %c0_3, %c0_4] : memref<2x8x32xf32, #tpu.memory_space<vmem>>, vector<2x8x32xf32>
    %c0_5 = arith.constant 0 : index
    %c0_6 = arith.constant 0 : index
    %c0_7 = arith.constant 0 : index
    %2 = vector.load %arg3[%c0_5, %c0_6, %c0_7] : memref<2x16x1xf32, #tpu.memory_space<vmem>>, vector<2x16x1xf32>
    %c0_8 = arith.constant 0 : index
    %c0_9 = arith.constant 0 : index
    %c0_10 = arith.constant 0 : index
    %3 = vector.load %arg4[%c0_8, %c0_9, %c0_10] : memref<2x1x8xf32, #tpu.memory_space<vmem>>, vector<2x1x8xf32>
    %c0_11 = arith.constant 0 : index
    %c0_12 = arith.constant 0 : index
    %4 = vector.load %arg5[%c0_11, %c0_12] : memref<1x32xf32, #tpu.memory_space<vmem>>, vector<1x32xf32>
    %c0_13 = arith.constant 0 : index
    %c0_14 = arith.constant 0 : index
    %5 = vector.load %arg6[%c0_13, %c0_14] : memref<1x32xf32, #tpu.memory_space<vmem>>, vector<1x32xf32>
    %c0_15 = arith.constant 0 : index
    %c0_16 = arith.constant 0 : index
    %6 = vector.load %arg7[%c0_15, %c0_16] : memref<1x32xf32, #tpu.memory_space<vmem>>, vector<1x32xf32>
    %c0_17 = arith.constant 0 : index
    %7 = memref.load %arg8[%c0_17] : memref<1xf32, #tpu.memory_space<smem>>
    %8 = vector.shape_cast %4 : vector<1x32xf32> to vector<1x1x32xf32>
    %9 = vector.broadcast %8 : vector<1x1x32xf32> to vector<2x16x32xf32>
    %10 = arith.mulf %0, %9 : vector<2x16x32xf32>
    %cst = arith.constant dense<0.000000e+00> : vector<2x16xf32>
    %11 = vector.multi_reduction <add>, %10, %cst [2] : vector<2x16x32xf32> to vector<2x16xf32>
    %12 = vector.shape_cast %11 : vector<2x16xf32> to vector<2x16x1xf32>
    %13 = vector.shape_cast %5 : vector<1x32xf32> to vector<1x1x32xf32>
    %14 = vector.broadcast %13 : vector<1x1x32xf32> to vector<2x8x32xf32>
    %15 = arith.mulf %1, %14 : vector<2x8x32xf32>
    %cst_18 = arith.constant dense<0.000000e+00> : vector<2x8xf32>
    %16 = vector.multi_reduction <add>, %15, %cst_18 [2] : vector<2x8x32xf32> to vector<2x8xf32>
    %17 = vector.shape_cast %16 : vector<2x8xf32> to vector<2x1x8xf32>
    %18 = vector.shape_cast %6 : vector<1x32xf32> to vector<1x1x32xf32>
    %19 = vector.broadcast %18 : vector<1x1x32xf32> to vector<2x16x32xf32>
    %20 = arith.mulf %0, %19 : vector<2x16x32xf32>
    "tpu.trace_start"() <{level = 10 : i32, message = "bch,bqh->bcq"}> : () -> ()
    %cst_19 = arith.constant dense<0.000000e+00> : vector<2x16x8xf32>
    %21 = tpu.matmul %20, %1, %cst_19 {dimension_numbers = #tpu.dot_dimension_numbers<[2], [2], [1], [1], [0, 0, 0, 1, 1, 1], [0], [0]>} : vector<2x16x32xf32>, vector<2x8x32xf32>, vector<2x16x8xf32> -> vector<2x16x8xf32>
    "tpu.trace_stop"() : () -> ()
    %22 = vector.broadcast %12 : vector<2x16x1xf32> to vector<2x16x8xf32>
    %23 = vector.broadcast %17 : vector<2x1x8xf32> to vector<2x16x8xf32>
    %24 = arith.addf %22, %23 : vector<2x16x8xf32>
    %25 = arith.addf %24, %21 : vector<2x16x8xf32>
    %26 = vector.broadcast %7 : f32 to vector<2x16x8xf32>
    %27 = arith.addf %25, %26 : vector<2x16x8xf32>
    %28 = vector.broadcast %2 : vector<2x16x1xf32> to vector<2x16x8xf32>
    %29 = arith.addf %27, %28 : vector<2x16x8xf32>
    %cst_20 = arith.constant dense<0xFF800000> : vector<2x8xf32>
    %30 = vector.multi_reduction <maximumf>, %29, %cst_20 [1] : vector<2x16x8xf32> to vector<2x8xf32>
    %31 = vector.shape_cast %30 : vector<2x8xf32> to vector<2x1x8xf32>
    %32 = vector.broadcast %31 : vector<2x1x8xf32> to vector<2x16x8xf32>
    %33 = arith.subf %29, %32 : vector<2x16x8xf32>
    %34 = math.exp %33 : vector<2x16x8xf32>
    %cst_21 = arith.constant dense<0.000000e+00> : vector<2x8xf32>
    %35 = vector.multi_reduction <add>, %34, %cst_21 [1] : vector<2x16x8xf32> to vector<2x8xf32>
    %36 = vector.shape_cast %35 : vector<2x8xf32> to vector<2x1x8xf32>
    %37 = vector.broadcast %36 : vector<2x1x8xf32> to vector<2x16x8xf32>
    %38 = arith.divf %34, %37 : vector<2x16x8xf32>
    "tpu.trace_start"() <{level = 10 : i32, message = "bcq,bch->bqh"}> : () -> ()
    %cst_22 = arith.constant dense<0.000000e+00> : vector<2x8x32xf32>
    %39 = tpu.matmul %38, %0, %cst_22 {dimension_numbers = #tpu.dot_dimension_numbers<[1], [1], [2], [2], [0, 0, 0, 2, 1, 2], [0], [0]>} : vector<2x16x8xf32>, vector<2x16x32xf32>, vector<2x8x32xf32> -> vector<2x8x32xf32>
    "tpu.trace_stop"() : () -> ()
    %40 = vector.broadcast %3 : vector<2x1x8xf32> to vector<2x16x8xf32>
    %41 = arith.addf %27, %40 : vector<2x16x8xf32>
    %cst_23 = arith.constant dense<0xFF800000> : vector<2x16xf32>
    %42 = vector.multi_reduction <maximumf>, %41, %cst_23 [2] : vector<2x16x8xf32> to vector<2x16xf32>
    %43 = vector.shape_cast %42 : vector<2x16xf32> to vector<2x16x1xf32>
    %44 = vector.broadcast %43 : vector<2x16x1xf32> to vector<2x16x8xf32>
    %45 = arith.subf %41, %44 : vector<2x16x8xf32>
    %46 = math.exp %45 : vector<2x16x8xf32>
    %cst_24 = arith.constant dense<0.000000e+00> : vector<2x16xf32>
    %47 = vector.multi_reduction <add>, %46, %cst_24 [2] : vector<2x16x8xf32> to vector<2x16xf32>
    %48 = vector.shape_cast %47 : vector<2x16xf32> to vector<2x16x1xf32>
    %49 = vector.broadcast %48 : vector<2x16x1xf32> to vector<2x16x8xf32>
    %50 = arith.divf %46, %49 : vector<2x16x8xf32>
    "tpu.trace_start"() <{level = 10 : i32, message = "bcq,bqh->bch"}> : () -> ()
    %cst_25 = arith.constant dense<0.000000e+00> : vector<2x16x32xf32>
    %51 = tpu.matmul %50, %1, %cst_25 {dimension_numbers = #tpu.dot_dimension_numbers<[2], [1], [1], [2], [0, 0, 0, 1, 1, 2], [0], [0]>} : vector<2x16x8xf32>, vector<2x8x32xf32>, vector<2x16x32xf32> -> vector<2x16x32xf32>
    %cst_26 = arith.constant dense<0.000000e+00> : vector<2x16x32xf32>
    %52 = tpu.matmul %50, %39, %cst_26 {dimension_numbers = #tpu.dot_dimension_numbers<[2], [1], [1], [2], [0, 0, 0, 1, 1, 2], [0], [0]>} : vector<2x16x8xf32>, vector<2x8x32xf32>, vector<2x16x32xf32> -> vector<2x16x32xf32>
    "tpu.trace_stop"() : () -> ()
    %c0_27 = arith.constant 0 : index
    %c0_28 = arith.constant 0 : index
    %c0_29 = arith.constant 0 : index
    %53 = vector.load %arg9[%c0_27, %c0_28, %c0_29] : memref<2x16x128xf32, #tpu.memory_space<vmem>>, vector<2x16x32xf32>
    tpu.vector_store %arg9[%c0_27, %c0_28, %c0_29], %0 {strides = array<i32>} : memref<2x16x128xf32, #tpu.memory_space<vmem>>, vector<2x16x32xf32>,
    %c0_30 = arith.constant 0 : index
    %c0_31 = arith.constant 0 : index
    %c32 = arith.constant 32 : index
    %54 = vector.load %arg9[%c0_30, %c0_31, %c32] : memref<2x16x128xf32, #tpu.memory_space<vmem>>, vector<2x16x32xf32>
    tpu.vector_store %arg9[%c0_30, %c0_31, %c32], %51 {strides = array<i32>} : memref<2x16x128xf32, #tpu.memory_space<vmem>>, vector<2x16x32xf32>,
    %55 = arith.mulf %0, %51 : vector<2x16x32xf32>
    %c0_32 = arith.constant 0 : index
    %c0_33 = arith.constant 0 : index
    %c64 = arith.constant 64 : index
    %56 = vector.load %arg9[%c0_32, %c0_33, %c64] : memref<2x16x128xf32, #tpu.memory_space<vmem>>, vector<2x16x32xf32>
    tpu.vector_store %arg9[%c0_32, %c0_33, %c64], %55 {strides = array<i32>} : memref<2x16x128xf32, #tpu.memory_space<vmem>>, vector<2x16x32xf32>,
    %57 = arith.mulf %0, %52 : vector<2x16x32xf32>
    %c0_34 = arith.constant 0 : index
    %c0_35 = arith.constant 0 : index
    %c96 = arith.constant 96 : index
    %58 = vector.load %arg9[%c0_34, %c0_35, %c96] : memref<2x16x128xf32, #tpu.memory_space<vmem>>, vector<2x16x32xf32>
    tpu.vector_store %arg9[%c0_34, %c0_35, %c96], %57 {strides = array<i32>} : memref<2x16x128xf32, #tpu.memory_space<vmem>>, vector<2x16x32xf32>,
    return
  }
  func.func @transform_0(%arg0: i32) -> (i32, i32, i32) {
    %c0_i32 = arith.constant 0 : i32
    %c0_i32_0 = arith.constant 0 : i32
    %c0_i32_1 = arith.constant 0 : i32
    return %arg0, %c0_i32, %c0_i32_0 : i32, i32, i32
  }
  func.func @transform_1(%arg0: i32) -> (i32, i32, i32) {
    %c0_i32 = arith.constant 0 : i32
    %c0_i32_0 = arith.constant 0 : i32
    %c0_i32_1 = arith.constant 0 : i32
    return %arg0, %c0_i32, %c0_i32_0 : i32, i32, i32
  }
  func.func @transform_2(%arg0: i32) -> (i32, i32, i32) {
    %c0_i32 = arith.constant 0 : i32
    %c0_i32_0 = arith.constant 0 : i32
    %c0_i32_1 = arith.constant 0 : i32
    return %arg0, %c0_i32, %c0_i32_0 : i32, i32, i32
  }
  func.func @transform_3(%arg0: i32) -> (i32, i32, i32) {
    %c0_i32 = arith.constant 0 : i32
    %c0_i32_0 = arith.constant 0 : i32
    %c0_i32_1 = arith.constant 0 : i32
    return %arg0, %c0_i32, %c0_i32_0 : i32, i32, i32
  }
  func.func @transform_4(%arg0: i32) -> (i32, i32) {
    %c0_i32 = arith.constant 0 : i32
    %c0_i32_0 = arith.constant 0 : i32
    %c0_i32_1 = arith.constant 0 : i32
    return %c0_i32, %c0_i32_0 : i32, i32
  }
  func.func @transform_5(%arg0: i32) -> (i32, i32) {
    %c0_i32 = arith.constant 0 : i32
    %c0_i32_0 = arith.constant 0 : i32
    %c0_i32_1 = arith.constant 0 : i32
    return %c0_i32, %c0_i32_0 : i32, i32
  }
  func.func @transform_6(%arg0: i32) -> (i32, i32) {
    %c0_i32 = arith.constant 0 : i32
    %c0_i32_0 = arith.constant 0 : i32
    %c0_i32_1 = arith.constant 0 : i32
    return %c0_i32, %c0_i32_0 : i32, i32
  }
  func.func @transform_7(%arg0: i32) -> i32 {
    %c0_i32 = arith.constant 0 : i32
    %c0_i32_0 = arith.constant 0 : i32
    return %c0_i32 : i32
  }
  func.func @transform_8(%arg0: i32) -> (i32, i32, i32) {
    %c0_i32 = arith.constant 0 : i32
    %c0_i32_0 = arith.constant 0 : i32
    %c0_i32_1 = arith.constant 0 : i32
    return %arg0, %c0_i32, %c0_i32_0 : i32, i32, i32
  }
}

</mosaic_0001>

<llo_original>
// kernel: tpu_custom_call.1
$region0: #{tpu_custom_call.1}
  #allocation0 [shape = 'u32[]', space=smem, size = 0x4, offset = 0x4, fixed_abs, tag = 'smem constant byte address 0x4 - core index']
  #allocation1 [shape = 'u32[72,128]{1,0:T(1,128)}', space=vmem, size = 0x9000, scoped, tag = 'internal scratch']
  #allocation2 [shape = 'f32[1]{0:T(128)S(6)}', space=smem, size = 0x200, scoped, tag = 'scoped memory for tpu_custom_call.1']
  %s0 = inlined_call_operand.vmem [shape: f32[2,16,32], index: 0, kind: input, shape index: {}]
  %s1 = inlined_call_operand.hbm [shape: f32[2,8,32], index: 1, kind: input, shape index: {}]
  %s2 = inlined_call_operand.vmem [shape: f32[2,16,1], index: 2, kind: input, shape index: {}]
  %s3 = inlined_call_operand.vmem [shape: f32[2,1,8], index: 3, kind: input, shape index: {}]
  %s4 = inlined_call_operand.vmem [shape: f32[1,32], index: 4, kind: input, shape index: {}]
  %s5 = inlined_call_operand.vmem [shape: f32[1,32], index: 5, kind: input, shape index: {}]
  %s6 = inlined_call_operand.vmem [shape: f32[1,32], index: 6, kind: input, shape index: {}]
  %s7 = inlined_call_operand.<no memory space> [shape: f32[1], index: 7, kind: input, shape index: {}]
  %s8 = inlined_call_operand.hbm [shape: f32[2,16,128], index: 8, kind: output, shape index: {}]
  %s9 = sld [smem:[#allocation0]]
  $region46: #{tpu_custom_call.1} parent=0
    _
  %s11 = ssub.s32 1, %s9
  %s12 = scalar_select 0, %s11, %s9
  %13 = sst [smem:[#allocation2]] %s7
  $region1: #{tpu_custom_call.1} parent=0
    #allocation3 [shape = 'u8[8192]{0}', space=vmem, size = 0x2000, scoped, tag = 'input window, operand 1, single buffered']
    #allocation4 [shape = 's32[1]{0}', space=sflag, size = 0x4, scoped, tag = 'scoped memory for tpu_custom_call.1']
    #allocation5 [shape = 's32[1]{0}', space=sflag, size = 0x4, scoped, tag = 'scoped memory for tpu_custom_call.1']
    #allocation6 [shape = 'u8[16384]{0}', space=vmem, size = 0x4000, scoped, tag = 'output window, operand 0, single buffered']
    %14 = vsyncpa [#allocation4], 0
    %15 = vsyncpa [#allocation5], 0
    // Predicated region
    $region2: #{tpu_custom_call.1} parent=1 // pred_check
      _
    $region3: #{tpu_custom_call.1} parent=1 // pred_check_branch
      %17 = sbr.rel (0) target = $region5
    $region4: #{tpu_custom_call.1} parent=1 // pred_region
      _
    $region5: #{tpu_custom_call.1} parent=1 // pred_fallthru
      _
    // Predicated region
    $region6: #{tpu_custom_call.1} parent=1 // pred_check
      _
    $region7: #{tpu_custom_call.1} parent=1 // pred_check_branch
      %19 = sbr.rel (0) target = $region9
    $region8: #{tpu_custom_call.1} parent=1 // pred_region
      %21 = vsyncadd [#allocation4], 0
      %s22 = sshll.u32 %s1, 4
      %s23 = int_to_ptr.hbm [resolvable:$true] %s22
      %s24 = sshll.u32 [#allocation3], 4
      %s25 = int_to_ptr.vmem [resolvable:$true] %s24
      %30 = dma.hbm_to_vmem [thread:$0]  %s23, 256, %s25, [#allocation4], 128, 128, 8
    $region9: #{tpu_custom_call.1} parent=1 // pred_fallthru
      _
    // Predicated region
    $region10: #{tpu_custom_call.1} parent=1 // pred_check
      _
    $region11: #{tpu_custom_call.1} parent=1 // pred_check_branch
      %32 = sbr.rel (0) target = $region13
    $region12: #{tpu_custom_call.1} parent=1 // pred_region
      _
    $region13: #{tpu_custom_call.1} parent=1 // pred_fallthru
      _
    // Predicated region
    $region14: #{tpu_custom_call.1} parent=1 // pred_check
      _
    $region15: #{tpu_custom_call.1} parent=1 // pred_check_branch
      %34 = sbr.rel (0) target = $region17
    $region16: #{tpu_custom_call.1} parent=1 // pred_region
      _
    $region17: #{tpu_custom_call.1} parent=1 // pred_fallthru
      _
    // Predicated region
    $region18: #{tpu_custom_call.1} parent=1 // pred_check
      _
    $region19: #{tpu_custom_call.1} parent=1 // pred_check_branch
      %36 = sbr.rel (0) target = $region21
    $region20: #{tpu_custom_call.1} parent=1 // pred_region
      _
    $region21: #{tpu_custom_call.1} parent=1 // pred_fallthru
      _
    // Predicated region
    $region22: #{tpu_custom_call.1} parent=1 // pred_check
      _
    $region23: #{tpu_custom_call.1} parent=1 // pred_check_branch
      %38 = sbr.rel (0) target = $region25
    $region24: #{tpu_custom_call.1} parent=1 // pred_region
      _
    $region25: #{tpu_custom_call.1} parent=1 // pred_fallthru
      _
    // Predicated region
    $region26: #{tpu_custom_call.1} parent=1 // pred_check
      _
    $region27: #{tpu_custom_call.1} parent=1 // pred_check_branch
      %40 = sbr.rel (0) target = $region29
    $region28: #{tpu_custom_call.1} parent=1 // pred_region
      _
    $region29: #{tpu_custom_call.1} parent=1 // pred_fallthru
      _
    // Predicated region
    $region30: #{tpu_custom_call.1} parent=1 // pred_check
      _
    $region31: #{tpu_custom_call.1} parent=1 // pred_check_branch
      %42 = sbr.rel (0) target = $region33
    $region32: #{tpu_custom_call.1} parent=1 // pred_region
      _
    $region33: #{tpu_custom_call.1} parent=1 // pred_fallthru
      _
    // Predicated region
    $region34: #{tpu_custom_call.1} parent=1 // pred_check
      _
    $region35: #{tpu_custom_call.1} parent=1 // pred_check_branch
      %44 = sbr.rel (0) target = $region37
    $region36: #{tpu_custom_call.1} parent=1 // pred_region
      %46 = dma.done [#allocation4], 256
    $region37: #{tpu_custom_call.1} parent=1 // pred_fallthru
      _
    %v47 = vld [vmem:[%s0] sm:$0xff]
    %v48 = vld [vmem:[%s0 + $0x8] sm:$0xff]
    %v49 = vld [vmem:[%s0 + $0x10] sm:$0xff]
    %v50 = vld [vmem:[%s0 + $0x18] sm:$0xff]
    %v51 = vld [vmem:[#allocation3] sm:$0xff]
    %v52 = vld [vmem:[#allocation3 + $0x8] sm:$0xff]
    %v53 = vld [vmem:[%s2] sm:$0xff]
    %v54 = vld [vmem:[%s2 + $0x8] sm:$0xff]
    %v55 = vld [vmem:[%s2 + $0x10] sm:$0xff]
    %v56 = vld [vmem:[%s2 + $0x18] sm:$0xff]
    %v57 = vld [vmem:[%s3] sm:$0x1]
    %v58 = vld [vmem:[%s3 + $0x1] sm:$0x1]
    %v59 = vld [vmem:[%s4] sm:$0x1]
    %v60 = vld [vmem:[%s5] sm:$0x1]
    %v61 = vld [vmem:[%s6] sm:$0x1]
    %s62 = sld [smem:[#allocation2]]
    %v64 = vperm.slane %v59, 0
    %v66 = vmul.f32 %v47, %v64
    %v67 = vmul.f32 %v48, %v64
    %v68 = vmul.f32 %v49, %v64
    %v69 = vmul.f32 %v50, %v64
    %vm70 = vcmask 261120
    %v71 = vsel %vm70, %v66, 0.0
    %72 = vadd.xlane.f32.xlu0 %v71
    %v73 = vpop.xlane.xlu0 %72
    %v74 = vsel %vm70, %v67, 0.0
    %75 = vadd.xlane.f32.xlu0 %v74
    %v76 = vpop.xlane.xlu0 %75
    %v77 = vsel %vm70, %v68, 0.0
    %78 = vadd.xlane.f32.xlu0 %v77
    %v79 = vpop.xlane.xlu0 %78
    %v80 = vsel %vm70, %v69, 0.0
    %81 = vadd.xlane.f32.xlu0 %v80
    %v82 = vpop.xlane.xlu0 %81
    %v84 = vperm.slane %v60, 0
    %v86 = vmul.f32 %v51, %v84
    %v87 = vmul.f32 %v52, %v84
    %v88 = vsel %vm70, %v86, 0.0
    %89 = vadd.xlane.f32.xlu0 %v88
    %v90 = vpop.xlane.xlu0 %89
    %v91 = vsel %vm70, %v87, 0.0
    %92 = vadd.xlane.f32.xlu0 %v91
    %v93 = vpop.xlane.xlu0 %92
    %v95 = vperm.slane %v61, 0
    %v97 = vmul.f32 %v47, %v95
    %v98 = vmul.f32 %v48, %v95
    %v99 = vmul.f32 %v49, %v95
    %v100 = vmul.f32 %v50, %v95
    %v102 = vsel %vm70, %v97, 0
    %v105 = vsel %vm70, %v98, 0
    %v108 = vsel %vm70, %v51, 0
    %110 = vmatpush.xpose.msra.mxu0 0.0
    %111 = vmatpush.xpose.msra.mxu0 0.0
    %112 = vmatpush.xpose.msra.mxu0 0.0
    %113 = vmatpush.xpose.msra.mxu0 0.0
    %114 = vmatpush.xpose.msra.mxu0 0.0
    %115 = vmatpush.xpose.msra.mxu0 0.0
    %116 = vmatpush.xpose.msra.mxu0 0.0
    %117 = vmatpush.xpose.msra.mxu0 0.0
    %118 = vmatpush.xpose.msra.mxu0 0.0
    %119 = vmatpush.xpose.msra.mxu0 0.0
    %120 = vmatpush.xpose.msra.mxu0 0.0
    %121 = vmatpush.xpose.msra.mxu0 0.0
    %122 = vmatpush.xpose.msra.mxu0 0.0
    %123 = vmatpush.xpose.msra.mxu0 0.0
    %124 = vmatpush.xpose.msra.mxu0 0.0
    %125 = vmatpush.xpose.msra.mxu0 %v108
    %126 = vmatmul.f32.gmra.mxu0 %v102
    %v127 = vpop.f32.mrf.mxu0
    %v128 = vadd.f32 0.0, %v127
    %129 = vmatmul.f32.gmra.mxu0 %v105
    %v130 = vpop.f32.mrf.mxu0
    %v131 = vadd.f32 0.0, %v130
    %132 = vdwg.mxu0
    %v134 = vsel %vm70, %v99, 0
    %v137 = vsel %vm70, %v100, 0
    %v140 = vsel %vm70, %v52, 0
    %142 = vmatpush.xpose.msra.mxu0 0.0
    %143 = vmatpush.xpose.msra.mxu0 0.0
    %144 = vmatpush.xpose.msra.mxu0 0.0
    %145 = vmatpush.xpose.msra.mxu0 0.0
    %146 = vmatpush.xpose.msra.mxu0 0.0
    %147 = vmatpush.xpose.msra.mxu0 0.0
    %148 = vmatpush.xpose.msra.mxu0 0.0
    %149 = vmatpush.xpose.msra.mxu0 0.0
    %150 = vmatpush.xpose.msra.mxu0 0.0
    %151 = vmatpush.xpose.msra.mxu0 0.0
    %152 = vmatpush.xpose.msra.mxu0 0.0
    %153 = vmatpush.xpose.msra.mxu0 0.0
    %154 = vmatpush.xpose.msra.mxu0 0.0
    %155 = vmatpush.xpose.msra.mxu0 0.0
    %156 = vmatpush.xpose.msra.mxu0 0.0
    %157 = vmatpush.xpose.msra.mxu0 %v140
    %158 = vmatmul.f32.gmra.mxu0 %v134
    %v159 = vpop.f32.mrf.mxu0
    %v160 = vadd.f32 0.0, %v159
    %161 = vmatmul.f32.gmra.mxu0 %v137
    %v162 = vpop.f32.mrf.mxu0
    %v163 = vadd.f32 0.0, %v162
    %164 = vdwg.mxu0
    %v167 = vlaneseq
    %v168 = vand.u32 %v167, 127
    %v169 = vperm.slane %v90, %v168
    %v170 = vperm.slane %v93, %v168
    %vm171 = vcmask 1042434
    %v172 = vsel %vm171, %v169, %v169
    %vm173 = vcmask 1043459
    %v174 = vsel %vm173, %v169, %v172
    %vm175 = vcmask 1044484
    %v176 = vsel %vm175, %v169, %v174
    %vm177 = vcmask 1045509
    %v178 = vsel %vm177, %v169, %v176
    %vm179 = vcmask 1046534
    %v180 = vsel %vm179, %v169, %v178
    %vm181 = vcmask 1047559
    %v182 = vsel %vm181, %v169, %v180
    %v183 = vsel %vm171, %v170, %v170
    %v184 = vsel %vm173, %v170, %v183
    %v185 = vsel %vm175, %v170, %v184
    %v186 = vsel %vm177, %v170, %v185
    %v187 = vsel %vm179, %v170, %v186
    %v188 = vsel %vm181, %v170, %v187
    %v191 = vadd.f32 %v73, %v182
    %v192 = vadd.f32 %v76, %v182
    %v193 = vadd.f32 %v79, %v188
    %v194 = vadd.f32 %v82, %v188
    %v195 = vadd.f32 %v191, %v128
    %v196 = vadd.f32 %v192, %v131
    %v197 = vadd.f32 %v193, %v160
    %v198 = vadd.f32 %v194, %v163
    %v199 = vstv %s62
    %v200 = vadd.f32 %v195, %v199
    %v201 = vadd.f32 %v196, %v199
    %v202 = vadd.f32 %v197, %v199
    %v203 = vadd.f32 %v198, %v199
    %205 = vset.pattern.permute.xlu0 0
    %206 = vperm.xlu0 %205, %v53
    %v207 = vpop.permute.xlu0 %206
    %210 = vset.pattern.permute.xlu0 0
    %211 = vperm.xlu0 %210, %v54
    %v212 = vpop.permute.xlu0 %211
    %215 = vset.pattern.permute.xlu0 0
    %216 = vperm.xlu0 %215, %v55
    %v217 = vpop.permute.xlu0 %216
    %220 = vset.pattern.permute.xlu0 0
    %221 = vperm.xlu0 %220, %v56
    %v222 = vpop.permute.xlu0 %221
    %v224 = vadd.f32 %v200, %v207
    %v225 = vadd.f32 %v201, %v212
    %v226 = vadd.f32 %v202, %v217
    %v227 = vadd.f32 %v203, %v222
    %vm228 = vcmask 64512
    %v229 = vsel %vm228, %v224, -inf
    %v230 = vsel %vm228, %v225, -inf
    %v231 = vmax.f32 %v229, %v230
    %v232 = vrot.slane %v231, 4
    %v233 = vmax.f32 %v231, %v232
    %v234 = vrot.slane %v233, 2
    %v235 = vmax.f32 %v233, %v234
    %v236 = vrot.slane %v235, 1
    %v237 = vmax.f32 %v235, %v236
    %v238 = vsel %vm228, %v226, -inf
    %v239 = vsel %vm228, %v227, -inf
    %v240 = vmax.f32 %v238, %v239
    %v241 = vrot.slane %v240, 4
    %v242 = vmax.f32 %v240, %v241
    %v243 = vrot.slane %v242, 2
    %v244 = vmax.f32 %v242, %v243
    %v245 = vrot.slane %v244, 1
    %v246 = vmax.f32 %v244, %v245
    %v247 = vsub.f32 %v224, %v237
    %v248 = vsub.f32 %v225, %v237
    %v249 = vsub.f32 %v226, %v246
    %v250 = vsub.f32 %v227, %v246
    %v251 = vmul.f32 %v247, 1.442695
    %v252 = vpow.pop %v251
    %v253 = vmul.f32 %v248, 1.442695
    %v254 = vpow.pop %v253
    %v255 = vmul.f32 %v249, 1.442695
    %v256 = vpow.pop %v255
    %v257 = vmul.f32 %v250, 1.442695
    %v258 = vpow.pop %v257
    %v259 = vsel %vm228, %v252, 0.0
    %v260 = vsel %vm228, %v254, 0.0
    %v261 = vadd.f32 %v259, %v260
    %v262 = vrot.slane %v261, 4
    %v263 = vadd.f32 %v261, %v262
    %v264 = vrot.slane %v263, 2
    %v265 = vadd.f32 %v263, %v264
    %v266 = vrot.slane %v265, 1
    %v267 = vadd.f32 %v265, %v266
    %v268 = vsel %vm228, %v256, 0.0
    %v269 = vsel %vm228, %v258, 0.0
    %v270 = vadd.f32 %v268, %v269
    %v271 = vrot.slane %v270, 4
    %v272 = vadd.f32 %v270, %v271
    %v273 = vrot.slane %v272, 2
    %v274 = vadd.f32 %v272, %v273
    %v275 = vrot.slane %v274, 1
    %v276 = vadd.f32 %v274, %v275
    %v277 = vrcp.pop %v267
    %v278 = vmul.f32 %v267, %v277
    %v279 = vsub.f32 1.0, %v278
    %v280 = vmul.f32 %v277, %v279
    %v281 = vadd.f32 %v277, %v280
    %vm282 = vweird.f32 %v267
    %vm283 = vweird.f32 %v277
    %vm284 = vmor %vm282, %vm283
    %v285 = vsel %vm284, %v277, %v281
    %v286 = vand.u32 2147483647, %v267
    %vm287 = vcmp.eq.f32.partialorder %v286, 8.507059e+37
    %v288 = vand.u32 %v267, 2147483648
    %v289 = vor.u32 1.1754944e-38, %v288
    %v290 = vsel %vm287, %v289, %v285
    %v291 = vmul.f32 %v252, %v290
    %v292 = vmul.f32 %v254, %v290
    %v293 = vrcp.pop %v276
    %v294 = vmul.f32 %v276, %v293
    %v295 = vsub.f32 1.0, %v294
    %v296 = vmul.f32 %v293, %v295
    %v297 = vadd.f32 %v293, %v296
    %vm298 = vweird.f32 %v276
    %vm299 = vweird.f32 %v293
    %vm300 = vmor %vm298, %vm299
    %v301 = vsel %vm300, %v293, %v297
    %v302 = vand.u32 2147483647, %v276
    %vm303 = vcmp.eq.f32.partialorder %v302, 8.507059e+37
    %v304 = vand.u32 %v276, 2147483648
    %v305 = vor.u32 1.1754944e-38, %v304
    %v306 = vsel %vm303, %v305, %v301
    %v307 = vmul.f32 %v256, %v306
    %v308 = vmul.f32 %v258, %v306
    %309 = vxpose.xlu0.b32.start [1/16] %v291, 128
    %310 = vxpose.xlu0.b32.cont [2/16] %v292, 128
    %311 = vxpose.xlu0.b32.cont [3/16] 0.0, 128
    %312 = vxpose.xlu0.b32.cont [4/16] 0.0, 128
    %313 = vxpose.xlu0.b32.cont [5/16] 0.0, 128
    %314 = vxpose.xlu0.b32.cont [6/16] 0.0, 128
    %315 = vxpose.xlu0.b32.cont [7/16] 0.0, 128
    %316 = vxpose.xlu0.b32.cont [8/16] 0.0, 128
    %317 = vxpose.xlu0.b32.cont [9/16] 0.0, 128
    %318 = vxpose.xlu0.b32.cont [10/16] 0.0, 128
    %319 = vxpose.xlu0.b32.cont [11/16] 0.0, 128
    %320 = vxpose.xlu0.b32.cont [12/16] 0.0, 128
    %321 = vxpose.xlu0.b32.cont [13/16] 0.0, 128
    %322 = vxpose.xlu0.b32.cont [14/16] 0.0, 128
    %323 = vxpose.xlu0.b32.cont [15/16] 0.0, 128
    %324 = vxpose.xlu0.b32.end [16/16] 0.0, 128
    %v325 = vpop.trf.xlu0
    %v326 = vpop.trf.xlu0
    %v327 = vpop.trf.xlu0
    %v328 = vpop.trf.xlu0
    %v329 = vpop.trf.xlu0
    %v330 = vpop.trf.xlu0
    %v331 = vpop.trf.xlu0
    %v332 = vpop.trf.xlu0
    %v333 = vpop.trf.xlu0
    %v334 = vpop.trf.xlu0
    %v335 = vpop.trf.xlu0
    %v336 = vpop.trf.xlu0
    %v337 = vpop.trf.xlu0
    %v338 = vpop.trf.xlu0
    %v339 = vpop.trf.xlu0
    %v340 = vpop.trf.xlu0
    %vm341 = vcmask 130048
    %v343 = vsel %vm341, %v325, 0
    %345 = vmatpush.msra.mxu0 0.0
    %346 = vmatpush.msra.mxu0 0.0
    %347 = vmatpush.msra.mxu0 0.0
    %348 = vmatpush.msra.mxu0 0.0
    %349 = vmatpush.msra.mxu0 0.0
    %350 = vmatpush.msra.mxu0 0.0
    %351 = vmatpush.msra.mxu0 0.0
    %352 = vmatpush.msra.mxu0 0.0
    %353 = vmatpush.msra.mxu0 0.0
    %354 = vmatpush.msra.mxu0 0.0
    %355 = vmatpush.msra.mxu0 0.0
    %356 = vmatpush.msra.mxu0 0.0
    %357 = vmatpush.msra.mxu0 0.0
    %358 = vmatpush.msra.mxu0 0.0
    %359 = vmatpush.msra.mxu0 %v48
    %360 = vmatpush.msra.mxu0 %v47
    %361 = vmatmul.f32.gmra.mxu0 %v343
    %v362 = vpop.f32.mrf.mxu0
    %v363 = vadd.f32 0.0, %v362
    %364 = vdwg.mxu0
    %365 = vxpose.xlu0.b32.start [1/16] %v307, 128
    %366 = vxpose.xlu0.b32.cont [2/16] %v308, 128
    %367 = vxpose.xlu0.b32.cont [3/16] 0.0, 128
    %368 = vxpose.xlu0.b32.cont [4/16] 0.0, 128
    %369 = vxpose.xlu0.b32.cont [5/16] 0.0, 128
    %370 = vxpose.xlu0.b32.cont [6/16] 0.0, 128
    %371 = vxpose.xlu0.b32.cont [7/16] 0.0, 128
    %372 = vxpose.xlu0.b32.cont [8/16] 0.0, 128
    %373 = vxpose.xlu0.b32.cont [9/16] 0.0, 128
    %374 = vxpose.xlu0.b32.cont [10/16] 0.0, 128
    %375 = vxpose.xlu0.b32.cont [11/16] 0.0, 128
    %376 = vxpose.xlu0.b32.cont [12/16] 0.0, 128
    %377 = vxpose.xlu0.b32.cont [13/16] 0.0, 128
    %378 = vxpose.xlu0.b32.cont [14/16] 0.0, 128
    %379 = vxpose.xlu0.b32.cont [15/16] 0.0, 128
    %380 = vxpose.xlu0.b32.end [16/16] 0.0, 128
    %v381 = vpop.trf.xlu0
    %v382 = vpop.trf.xlu0
    %v383 = vpop.trf.xlu0
    %v384 = vpop.trf.xlu0
    %v385 = vpop.trf.xlu0
    %v386 = vpop.trf.xlu0
    %v387 = vpop.trf.xlu0
    %v388 = vpop.trf.xlu0
    %v389 = vpop.trf.xlu0
    %v390 = vpop.trf.xlu0
    %v391 = vpop.trf.xlu0
    %v392 = vpop.trf.xlu0
    %v393 = vpop.trf.xlu0
    %v394 = vpop.trf.xlu0
    %v395 = vpop.trf.xlu0
    %v396 = vpop.trf.xlu0
    %v398 = vsel %vm341, %v381, 0
    %400 = vmatpush.msra.mxu0 0.0
    %401 = vmatpush.msra.mxu0 0.0
    %402 = vmatpush.msra.mxu0 0.0
    %403 = vmatpush.msra.mxu0 0.0
    %404 = vmatpush.msra.mxu0 0.0
    %405 = vmatpush.msra.mxu0 0.0
    %406 = vmatpush.msra.mxu0 0.0
    %407 = vmatpush.msra.mxu0 0.0
    %408 = vmatpush.msra.mxu0 0.0
    %409 = vmatpush.msra.mxu0 0.0
    %410 = vmatpush.msra.mxu0 0.0
    %411 = vmatpush.msra.mxu0 0.0
    %412 = vmatpush.msra.mxu0 0.0
    %413 = vmatpush.msra.mxu0 0.0
    %414 = vmatpush.msra.mxu0 %v50
    %415 = vmatpush.msra.mxu0 %v49
    %416 = vmatmul.f32.gmra.mxu0 %v398
    %v417 = vpop.f32.mrf.mxu0
    %v418 = vadd.f32 0.0, %v417
    %419 = vdwg.mxu0
    %v422 = vperm.slane %v57, 0
    %v423 = vperm.slane %v58, 0
    %v426 = vadd.f32 %v200, %v422
    %v427 = vadd.f32 %v201, %v422
    %v428 = vadd.f32 %v202, %v423
    %v429 = vadd.f32 %v203, %v423
    %v430 = vsel %vm228, %v426, -inf
    %431 = vmax.xlane.f32.xlu0 %v430
    %v432 = vpop.xlane.xlu0 %431
    %v433 = vsel %vm228, %v427, -inf
    %434 = vmax.xlane.f32.xlu0 %v433
    %v435 = vpop.xlane.xlu0 %434
    %v436 = vsel %vm228, %v428, -inf
    %437 = vmax.xlane.f32.xlu0 %v436
    %v438 = vpop.xlane.xlu0 %437
    %v439 = vsel %vm228, %v429, -inf
    %440 = vmax.xlane.f32.xlu0 %v439
    %v441 = vpop.xlane.xlu0 %440
    %v442 = vsub.f32 %v426, %v432
    %v443 = vsub.f32 %v427, %v435
    %v444 = vsub.f32 %v428, %v438
    %v445 = vsub.f32 %v429, %v441
    %v446 = vmul.f32 %v442, 1.442695
    %v447 = vpow.pop %v446
    %v448 = vmul.f32 %v443, 1.442695
    %v449 = vpow.pop %v448
    %v450 = vmul.f32 %v444, 1.442695
    %v451 = vpow.pop %v450
    %v452 = vmul.f32 %v445, 1.442695
    %v453 = vpow.pop %v452
    %v454 = vsel %vm228, %v447, 0.0
    %455 = vadd.xlane.f32.xlu0 %v454
    %v456 = vpop.xlane.xlu0 %455
    %v457 = vsel %vm228, %v449, 0.0
    %458 = vadd.xlane.f32.xlu0 %v457
    %v459 = vpop.xlane.xlu0 %458
    %v460 = vsel %vm228, %v451, 0.0
    %461 = vadd.xlane.f32.xlu0 %v460
    %v462 = vpop.xlane.xlu0 %461
    %v463 = vsel %vm228, %v453, 0.0
    %464 = vadd.xlane.f32.xlu0 %v463
    %v465 = vpop.xlane.xlu0 %464
    %v466 = vrcp.pop %v456
    %v467 = vmul.f32 %v456, %v466
    %v468 = vsub.f32 1.0, %v467
    %v469 = vmul.f32 %v466, %v468
    %v470 = vadd.f32 %v466, %v469
    %vm471 = vweird.f32 %v456
    %vm472 = vweird.f32 %v466
    %vm473 = vmor %vm471, %vm472
    %v474 = vsel %vm473, %v466, %v470
    %v475 = vand.u32 2147483647, %v456
    %vm476 = vcmp.eq.f32.partialorder %v475, 8.507059e+37
    %v477 = vand.u32 %v456, 2147483648
    %v478 = vor.u32 1.1754944e-38, %v477
    %v479 = vsel %vm476, %v478, %v474
    %v480 = vmul.f32 %v447, %v479
    %v481 = vrcp.pop %v459
    %v482 = vmul.f32 %v459, %v481
    %v483 = vsub.f32 1.0, %v482
    %v484 = vmul.f32 %v481, %v483
    %v485 = vadd.f32 %v481, %v484
    %vm486 = vweird.f32 %v459
    %vm487 = vweird.f32 %v481
    %vm488 = vmor %vm486, %vm487
    %v489 = vsel %vm488, %v481, %v485
    %v490 = vand.u32 2147483647, %v459
    %vm491 = vcmp.eq.f32.partialorder %v490, 8.507059e+37
    %v492 = vand.u32 %v459, 2147483648
    %v493 = vor.u32 1.1754944e-38, %v492
    %v494 = vsel %vm491, %v493, %v489
    %v495 = vmul.f32 %v449, %v494
    %v496 = vrcp.pop %v462
    %v497 = vmul.f32 %v462, %v496
    %v498 = vsub.f32 1.0, %v497
    %v499 = vmul.f32 %v496, %v498
    %v500 = vadd.f32 %v496, %v499
    %vm501 = vweird.f32 %v462
    %vm502 = vweird.f32 %v496
    %vm503 = vmor %vm501, %vm502
    %v504 = vsel %vm503, %v496, %v500
    %v505 = vand.u32 2147483647, %v462
    %vm506 = vcmp.eq.f32.partialorder %v505, 8.507059e+37
    %v507 = vand.u32 %v462, 2147483648
    %v508 = vor.u32 1.1754944e-38, %v507
    %v509 = vsel %vm506, %v508, %v504
    %v510 = vmul.f32 %v451, %v509
    %v511 = vrcp.pop %v465
    %v512 = vmul.f32 %v465, %v511
    %v513 = vsub.f32 1.0, %v512
    %v514 = vmul.f32 %v511, %v513
    %v515 = vadd.f32 %v511, %v514
    %vm516 = vweird.f32 %v465
    %vm517 = vweird.f32 %v511
    %vm518 = vmor %vm516, %vm517
    %v519 = vsel %vm518, %v511, %v515
    %v520 = vand.u32 2147483647, %v465
    %vm521 = vcmp.eq.f32.partialorder %v520, 8.507059e+37
    %v522 = vand.u32 %v465, 2147483648
    %v523 = vor.u32 1.1754944e-38, %v522
    %v524 = vsel %vm521, %v523, %v519
    %v525 = vmul.f32 %v453, %v524
    %v527 = vsel %vm228, %v480, 0
    %v530 = vsel %vm228, %v495, 0
    %532 = vmatpush.msra.mxu0 0.0
    %533 = vmatpush.msra.mxu0 0.0
    %534 = vmatpush.msra.mxu0 0.0
    %535 = vmatpush.msra.mxu0 0.0
    %536 = vmatpush.msra.mxu0 0.0
    %537 = vmatpush.msra.mxu0 0.0
    %538 = vmatpush.msra.mxu0 0.0
    %539 = vmatpush.msra.mxu0 0.0
    %540 = vmatpush.msra.mxu0 0.0
    %541 = vmatpush.msra.mxu0 0.0
    %542 = vmatpush.msra.mxu0 0.0
    %543 = vmatpush.msra.mxu0 0.0
    %544 = vmatpush.msra.mxu0 0.0
    %545 = vmatpush.msra.mxu0 0.0
    %546 = vmatpush.msra.mxu0 0.0
    %547 = vmatpush.msra.mxu0 %v51
    %548 = vmatmul.f32.gmra.mxu0 %v527
    %v549 = vpop.f32.mrf.mxu0
    %v550 = vadd.f32 0.0, %v549
    %551 = vmatmul.f32.gmra.mxu0 %v530
    %v552 = vpop.f32.mrf.mxu0
    %v553 = vadd.f32 0.0, %v552
    %554 = vdwg.mxu0
    %v556 = vsel %vm228, %v510, 0
    %v559 = vsel %vm228, %v525, 0
    %561 = vmatpush.msra.mxu0 0.0
    %562 = vmatpush.msra.mxu0 0.0
    %563 = vmatpush.msra.mxu0 0.0
    %564 = vmatpush.msra.mxu0 0.0
    %565 = vmatpush.msra.mxu0 0.0
    %566 = vmatpush.msra.mxu0 0.0
    %567 = vmatpush.msra.mxu0 0.0
    %568 = vmatpush.msra.mxu0 0.0
    %569 = vmatpush.msra.mxu0 0.0
    %570 = vmatpush.msra.mxu0 0.0
    %571 = vmatpush.msra.mxu0 0.0
    %572 = vmatpush.msra.mxu0 0.0
    %573 = vmatpush.msra.mxu0 0.0
    %574 = vmatpush.msra.mxu0 0.0
    %575 = vmatpush.msra.mxu0 0.0
    %576 = vmatpush.msra.mxu0 %v52
    %577 = vmatmul.f32.gmra.mxu0 %v556
    %v578 = vpop.f32.mrf.mxu0
    %v579 = vadd.f32 0.0, %v578
    %580 = vmatmul.f32.gmra.mxu0 %v559
    %v581 = vpop.f32.mrf.mxu0
    %v582 = vadd.f32 0.0, %v581
    %583 = vdwg.mxu0
    %584 = vmatpush.msra.mxu0 0.0
    %585 = vmatpush.msra.mxu0 0.0
    %586 = vmatpush.msra.mxu0 0.0
    %587 = vmatpush.msra.mxu0 0.0
    %588 = vmatpush.msra.mxu0 0.0
    %589 = vmatpush.msra.mxu0 0.0
    %590 = vmatpush.msra.mxu0 0.0
    %591 = vmatpush.msra.mxu0 0.0
    %592 = vmatpush.msra.mxu0 0.0
    %593 = vmatpush.msra.mxu0 0.0
    %594 = vmatpush.msra.mxu0 0.0
    %595 = vmatpush.msra.mxu0 0.0
    %596 = vmatpush.msra.mxu0 0.0
    %597 = vmatpush.msra.mxu0 0.0
    %598 = vmatpush.msra.mxu0 0.0
    %599 = vmatpush.msra.mxu0 %v363
    %600 = vmatmul.f32.gmra.mxu0 %v527
    %v601 = vpop.f32.mrf.mxu0
    %v602 = vadd.f32 0.0, %v601
    %603 = vmatmul.f32.gmra.mxu0 %v530
    %v604 = vpop.f32.mrf.mxu0
    %v605 = vadd.f32 0.0, %v604
    %606 = vdwg.mxu0
    %607 = vmatpush.msra.mxu0 0.0
    %608 = vmatpush.msra.mxu0 0.0
    %609 = vmatpush.msra.mxu0 0.0
    %610 = vmatpush.msra.mxu0 0.0
    %611 = vmatpush.msra.mxu0 0.0
    %612 = vmatpush.msra.mxu0 0.0
    %613 = vmatpush.msra.mxu0 0.0
    %614 = vmatpush.msra.mxu0 0.0
    %615 = vmatpush.msra.mxu0 0.0
    %616 = vmatpush.msra.mxu0 0.0
    %617 = vmatpush.msra.mxu0 0.0
    %618 = vmatpush.msra.mxu0 0.0
    %619 = vmatpush.msra.mxu0 0.0
    %620 = vmatpush.msra.mxu0 0.0
    %621 = vmatpush.msra.mxu0 0.0
    %622 = vmatpush.msra.mxu0 %v418
    %623 = vmatmul.f32.gmra.mxu0 %v556
    %v624 = vpop.f32.mrf.mxu0
    %v625 = vadd.f32 0.0, %v624
    %626 = vmatmul.f32.gmra.mxu0 %v559
    %v627 = vpop.f32.mrf.mxu0
    %v628 = vadd.f32 0.0, %v627
    %629 = vdwg.mxu0
    %630 = vst.msk [vmem:[#allocation6] sm:$0xff] %vm70, %v47
    %631 = vst.msk [vmem:[#allocation6 + $0x8] sm:$0xff] %vm70, %v48
    %632 = vst.msk [vmem:[#allocation6 + $0x10] sm:$0xff] %vm70, %v49
    %633 = vst.msk [vmem:[#allocation6 + $0x18] sm:$0xff] %vm70, %v50
    %638 = vrot.lane.b32.xlu0 %v550, 32
    %v639 = vpop.permute.xlu0 %638
    %640 = vrot.lane.b32.xlu0 %v553, 32
    %v641 = vpop.permute.xlu0 %640
    %642 = vrot.lane.b32.xlu0 %v579, 32
    %v643 = vpop.permute.xlu0 %642
    %644 = vrot.lane.b32.xlu0 %v582, 32
    %v645 = vpop.permute.xlu0 %644
    %vm650 = vcmask 523520
    %651 = vst.msk [vmem:[#allocation6] sm:$0xff] %vm650, %v639
    %652 = vst.msk [vmem:[#allocation6 + $0x8] sm:$0xff] %vm650, %v641
    %653 = vst.msk [vmem:[#allocation6 + $0x10] sm:$0xff] %vm650, %v643
    %654 = vst.msk [vmem:[#allocation6 + $0x18] sm:$0xff] %vm650, %v645
    %v655 = vmul.f32 %v47, %v550
    %v656 = vmul.f32 %v48, %v553
    %v657 = vmul.f32 %v49, %v579
    %v658 = vmul.f32 %v50, %v582
    %663 = vrot.lane.b32.xlu0 %v655, 64
    %v664 = vpop.permute.xlu0 %663
    %665 = vrot.lane.b32.xlu0 %v656, 64
    %v666 = vpop.permute.xlu0 %665
    %667 = vrot.lane.b32.xlu0 %v657, 64
    %v668 = vpop.permute.xlu0 %667
    %669 = vrot.lane.b32.xlu0 %v658, 64
    %v670 = vpop.permute.xlu0 %669
    %vm675 = vcmask 785920
    %676 = vst.msk [vmem:[#allocation6] sm:$0xff] %vm675, %v664
    %677 = vst.msk [vmem:[#allocation6 + $0x8] sm:$0xff] %vm675, %v666
    %678 = vst.msk [vmem:[#allocation6 + $0x10] sm:$0xff] %vm675, %v668
    %679 = vst.msk [vmem:[#allocation6 + $0x18] sm:$0xff] %vm675, %v670
    %v680 = vmul.f32 %v47, %v602
    %v681 = vmul.f32 %v48, %v605
    %v682 = vmul.f32 %v49, %v625
    %v683 = vmul.f32 %v50, %v628
    %688 = vrot.lane.b32.xlu0 %v680, 96
    %v689 = vpop.permute.xlu0 %688
    %690 = vrot.lane.b32.xlu0 %v681, 96
    %v691 = vpop.permute.xlu0 %690
    %692 = vrot.lane.b32.xlu0 %v682, 96
    %v693 = vpop.permute.xlu0 %692
    %694 = vrot.lane.b32.xlu0 %v683, 96
    %v695 = vpop.permute.xlu0 %694
    %vm700 = vcmask 1048320
    %701 = vst.msk [vmem:[#allocation6] sm:$0xff] %vm700, %v689
    %702 = vst.msk [vmem:[#allocation6 + $0x8] sm:$0xff] %vm700, %v691
    %703 = vst.msk [vmem:[#allocation6 + $0x10] sm:$0xff] %vm700, %v693
    %704 = vst.msk [vmem:[#allocation6 + $0x18] sm:$0xff] %vm700, %v695
    // Predicated region
    $region38: #{tpu_custom_call.1} parent=1 // pred_check
      _
    $region39: #{tpu_custom_call.1} parent=1 // pred_check_branch
      %706 = sbr.rel (0) target = $region41
    $region40: #{tpu_custom_call.1} parent=1 // pred_region
      %708 = vsyncadd [#allocation5], 0
      %s709 = sshll.u32 [#allocation6], 4
      %s710 = int_to_ptr.vmem [resolvable:$true] %s709
      %s711 = sshll.u32 %s8, 4
      %s712 = int_to_ptr.hbm [resolvable:$true] %s711
      %717 = dma.vmem_to_hbm [thread:$0]  %s710, 512, %s712, [#allocation5], 128, 128, 8
    $region41: #{tpu_custom_call.1} parent=1 // pred_fallthru
      _
    // Predicated region
    $region42: #{tpu_custom_call.1} parent=1 // pred_check
      _
    $region43: #{tpu_custom_call.1} parent=1 // pred_check_branch
      %719 = sbr.rel (0) target = $region45
    $region44: #{tpu_custom_call.1} parent=1 // pred_region
      %721 = dma.done [#allocation5], 512
    $region45: #{tpu_custom_call.1} parent=1 // pred_fallthru
      _
    %722 = vsyncpa [#allocation4], 1
    %723 = vsyncpa [#allocation5], 1

</llo_original>
